<compile_context>
chip_gen: v5e
topology: v5e:2x2
jax: 0.10.0
libtpu: 0.0.40
codegen_flags: <defaults>
</compile_context>

<pallas_src>
import functools

import jax
import jax.numpy as jnp
from jax.experimental import pallas as pl
from jax.experimental.pallas import tpu as pltpu

BN_EPS = 1e-5


def _round_up(n, m):
    return ((n + m - 1) // m) * m


def expert_ffnn_kernel(x_ref, w1_ref, b1_ref, gamma_ref, beta_ref,
                       w2row_ref, b2_ref, o_ref,
                       sum_ref, sumsq_ref, mean_ref, scale_ref, c0_ref,
                       *, batch, tile_b):
    p = pl.program_id(0)     # 0: stats pass, 1: normalize + project pass
    i = pl.program_id(1)     # batch-tile index
    inv_b = 1.0 / batch      # static -> multiply instead of divide

    # h = ReLU(x @ W1 + b1); recomputed in both passes (MXU is idle, HBM is not).
    # NOTE: casting x/w1 to bf16 here would halve HBM traffic on v6e/v7x but changes
    # numerics vs the f32 PyTorch module, so inputs are kept f32.
    h = jnp.dot(x_ref[...], w1_ref[...], preferred_element_type=jnp.float32)
    h = jnp.maximum(h + b1_ref[...], 0.0)

    @pl.when(p == 0)
    def _stats_pass():
        @pl.when(i == 0)
        def _init():
            sum_ref[...] = jnp.zeros_like(sum_ref)
            sumsq_ref[...] = jnp.zeros_like(sumsq_ref)

        # Mask zero-padded rows out of the batch statistics.
        row = i * tile_b + jax.lax.broadcasted_iota(jnp.int32, (tile_b, 1), 0)
        hm = jnp.where(row < batch, h, 0.0)
        sum_ref[...] += jnp.sum(hm, axis=0, keepdims=True)
        sumsq_ref[...] += jnp.sum(hm * hm, axis=0, keepdims=True)

        # Keep the (revisited) output block deterministic during the stats pass.
        o_ref[...] = jnp.zeros_like(o_ref)

    @pl.when(p == 1)
    def _apply_pass():
        @pl.when(i == 0)
        def _finalize_stats():
            mean = sum_ref[...] * inv_b
            var = jnp.maximum(sumsq_ref[...] * inv_b - mean * mean, 0.0)
            inv_std = jax.lax.rsqrt(var + BN_EPS)          # EUP; VALU stays free
            mean_ref[...] = mean
            # Fold BN scale and the (H, 1) output projection into one per-feature scale.
            scale_ref[...] = inv_std * gamma_ref[...] * w2row_ref[...]
            # Constant term: beta @ w2 + b2 (scalar).
            c0_ref[...] = (jnp.sum(beta_ref[...] * w2row_ref[...],
                                   axis=1, keepdims=True) + b2_ref[...])

        centered = h - mean_ref[...]
        out = jnp.sum(centered * scale_ref[...], axis=1, keepdims=True) + c0_ref[...]
        o_ref[...] = out.astype(o_ref.dtype)


def expert_ffnn(x, w1, b1, gamma, beta, w2, b2, *, tile_b=None):
    """x: (B, input_size) f32; w1: (input_size, H); b1/gamma/beta: (1, H);
    w2: (H, 1); b2: (1, 1).  Returns (B, 1) f32."""
    B, IN = x.shape
    H = w1.shape[1]

    if tile_b is None:
        tile_b = min(256, _round_up(B, 8))
    tile_b = _round_up(tile_b, 8)
    Bp = _round_up(B, tile_b)
    if Bp != B:
        x = jnp.pad(x, ((0, Bp - B), (0, 0)))
    n_b = Bp // tile_b

    w2row = w2.reshape(1, H)   # lane-friendly row layout for the folded projection

    kernel = functools.partial(expert_ffnn_kernel, batch=B, tile_b=tile_b)

    const = lambda p, i: (0, 0)      # params resident across all grid steps
    tiled = lambda p, i: (i, 0)      # x / out stream over batch tiles

    itemsize = 4
    cost = pl.CostEstimate(
        flops=2 * (2 * Bp * IN * H) + 8 * Bp * H,
        transcendentals=H,
        bytes_accessed=(2 * Bp * IN + IN * H + 4 * H + 1 + 2 * Bp) * itemsize,
    )

    out = pl.pallas_call(
        kernel,
        out_shape=jax.ShapeDtypeStruct((Bp, 1), jnp.float32),
        grid_spec=pltpu.PrefetchScalarGridSpec(
            num_scalar_prefetch=0,
            grid=(2, n_b),                          # (pass, batch_tile); batch last
            in_specs=[
                pl.BlockSpec((tile_b, IN), tiled),  # x
                pl.BlockSpec((IN, H), const),       # w1
                pl.BlockSpec((1, H), const),        # b1
                pl.BlockSpec((1, H), const),        # gamma
                pl.BlockSpec((1, H), const),        # beta
                pl.BlockSpec((1, H), const),        # w2 (as a row vector)
                pl.BlockSpec((1, 1), const),        # b2
            ],
            out_specs=pl.BlockSpec((tile_b, 1), tiled),
            scratch_shapes=[
                pltpu.VMEM((1, H), jnp.float32),    # sum(h)
                pltpu.VMEM((1, H), jnp.float32),    # sum(h*h)
                pltpu.VMEM((1, H), jnp.float32),    # mean
                pltpu.VMEM((1, H), jnp.float32),    # folded scale = inv_std*gamma*w2
                pltpu.VMEM((1, 1), jnp.float32),    # beta @ w2 + b2
            ],
        ),
        compiler_params=pltpu.CompilerParams(
            # Both axes "arbitrary": BN stats are global over the batch, so the
            # batch-tile axis must not be sharded across TensorCores.
            dimension_semantics=("arbitrary", "arbitrary"),
        ),
        cost_estimate=cost,
    )(x, w1, b1, gamma, beta, w2row, b2)
    return out[:B]


def init_params(key, input_size, hidden_size):
    """Deterministic PyTorch-style (Kaiming-uniform-ish) init for the two Linears."""
    k1, k2, k3, k4 = jax.random.split(key, 4)
    bound1 = 1.0 / jnp.sqrt(input_size)
    # Stored pre-transposed: (in, hidden) so the kernel computes x @ w1.
    w1 = jax.random.uniform(k1, (input_size, hidden_size), jnp.float32, -bound1, bound1)
    b1 = jax.random.uniform(k2, (1, hidden_size), jnp.float32, -bound1, bound1)
    gamma = jnp.ones((1, hidden_size), jnp.float32)   # BatchNorm1d weight
    beta = jnp.zeros((1, hidden_size), jnp.float32)   # BatchNorm1d bias
    bound2 = 1.0 / jnp.sqrt(hidden_size)
    w2 = jax.random.uniform(k3, (hidden_size, 1), jnp.float32, -bound2, bound2)
    b2 = jax.random.uniform(k4, (1, 1), jnp.float32, -bound2, bound2)
    return w1, b1, gamma, beta, w2, b2


if __name__ == "__main__":
    key = jax.random.PRNGKey(0)
    kx, kp = jax.random.split(key)

    # Small but tiling-relevant shapes: 3 batch tiles of 128, with 84 padded rows
    # (exercises the stats mask and the padded-output slice).
    batch, input_size, hidden_size = 300, 64, 128
    x = jax.random.normal(kx, (batch, input_size), jnp.float32)
    w1, b1, gamma, beta, w2, b2 = init_params(kp, input_size, hidden_size)

    # Perturb BN affine params away from their (1, 0) init so the folded
    # gamma/beta paths are actually exercised.
    kg, kb = jax.random.split(jax.random.PRNGKey(42))
    gamma = gamma + 0.1 * jax.random.normal(kg, gamma.shape, jnp.float32)
    beta = beta + 0.1 * jax.random.normal(kb, beta.shape, jnp.float32)

    out = expert_ffnn(x, w1, b1, gamma, beta, w2, b2, tile_b=128)
    jax.block_until_ready(out)

    # Pure-JAX reference (PyTorch ExpertFFNN forward, BatchNorm1d in training mode).
    hp = jax.lax.Precision.HIGHEST
    h = jnp.maximum(jnp.dot(x, w1, precision=hp) + b1, 0.0)
    mean = h.mean(axis=0, keepdims=True)
    var = ((h - mean) ** 2).mean(axis=0, keepdims=True)
    hn = (h - mean) / jnp.sqrt(var + BN_EPS) * gamma + beta
    ref = jnp.dot(hn, w2, precision=hp) + b2

    assert out.shape == (batch, 1)
    err = jnp.max(jnp.abs(out - ref))
    assert jnp.allclose(out, ref, atol=1e-3, rtol=1e-3), f"mismatch vs reference: {err}"

    print("KERNEL_OK")
</pallas_src>

<mosaic_0001>
module attributes {stable_mosaic.version = 11 : i64} {
  func.func @expert_ffnn_kernel(%arg0: i32, %arg1: i32, %arg2: memref<128x64xf32, #tpu.memory_space<vmem>>, %arg3: memref<64x128xf32, #tpu.memory_space<vmem>>, %arg4: memref<1x128xf32, #tpu.memory_space<vmem>>, %arg5: memref<1x128xf32, #tpu.memory_space<vmem>>, %arg6: memref<1x128xf32, #tpu.memory_space<vmem>>, %arg7: memref<1x128xf32, #tpu.memory_space<vmem>>, %arg8: memref<1x1xf32, #tpu.memory_space<vmem>>, %arg9: memref<128x1xf32, #tpu.memory_space<vmem>>, %arg10: memref<1x128xf32, #tpu.memory_space<vmem>>, %arg11: memref<1x128xf32, #tpu.memory_space<vmem>>, %arg12: memref<1x128xf32, #tpu.memory_space<vmem>>, %arg13: memref<1x128xf32, #tpu.memory_space<vmem>>, %arg14: memref<1x1xf32, #tpu.memory_space<vmem>>) attributes {dimension_semantics = [#tpu.dimension_semantics<arbitrary>, #tpu.dimension_semantics<arbitrary>], iteration_bounds = array<i64: 2, 3>, scalar_prefetch = 0 : i64, scratch_operands = 5 : i64, tpu.core_type = #tpu.core_type<tc>, window_params = [{transform_indices = @transform_0, window_bounds = array<i64: 128, 64>}, {pipeline_mode = #tpu.pipeline_mode<synchronous>, transform_indices = @transform_1, window_bounds = array<i64: 64, 128>}, {pipeline_mode = #tpu.pipeline_mode<synchronous>, transform_indices = @transform_2, window_bounds = array<i64: 1, 128>}, {pipeline_mode = #tpu.pipeline_mode<synchronous>, transform_indices = @transform_3, window_bounds = array<i64: 1, 128>}, {pipeline_mode = #tpu.pipeline_mode<synchronous>, transform_indices = @transform_4, window_bounds = array<i64: 1, 128>}, {pipeline_mode = #tpu.pipeline_mode<synchronous>, transform_indices = @transform_5, window_bounds = array<i64: 1, 128>}, {pipeline_mode = #tpu.pipeline_mode<synchronous>, transform_indices = @transform_6, window_bounds = array<i64: 1, 1>}, {transform_indices = @transform_7, window_bounds = array<i64: 128, 1>}]} {
    %c0 = arith.constant 0 : index
    %c0_0 = arith.constant 0 : index
    %0 = vector.load %arg2[%c0, %c0_0] : memref<128x64xf32, #tpu.memory_space<vmem>>, vector<128x64xf32>
    %c0_1 = arith.constant 0 : index
    %c0_2 = arith.constant 0 : index
    %1 = vector.load %arg3[%c0_1, %c0_2] : memref<64x128xf32, #tpu.memory_space<vmem>>, vector<64x128xf32>
    %cst = arith.constant dense<0.000000e+00> : vector<128x128xf32>
    %2 = tpu.matmul %0, %1, %cst {dimension_numbers = #tpu.dot_dimension_numbers<[1], [0], [0], [1], [0, 0, 1, 1], [], []>} : vector<128x64xf32>, vector<64x128xf32>, vector<128x128xf32> -> vector<128x128xf32>
    %c0_3 = arith.constant 0 : index
    %c0_4 = arith.constant 0 : index
    %3 = vector.load %arg4[%c0_3, %c0_4] : memref<1x128xf32, #tpu.memory_space<vmem>>, vector<1x128xf32>
    %4 = vector.broadcast %3 : vector<1x128xf32> to vector<128x128xf32>
    %5 = arith.addf %2, %4 : vector<128x128xf32>
    %cst_5 = arith.constant 0.000000e+00 : f32
    %6 = vector.broadcast %cst_5 : f32 to vector<128x128xf32>
    %7 = arith.maximumf %5, %6 : vector<128x128xf32>
    %c0_i32 = arith.constant 0 : i32
    %8 = arith.cmpi eq, %arg0, %c0_i32 : i32
    %9 = arith.extui %8 : i1 to i32
    %c0_i32_6 = arith.constant 0 : i32
    %10 = arith.cmpi ne, %9, %c0_i32_6 : i32
    scf.if %10 {
      %c0_i32_8 = arith.constant 0 : i32
      %14 = arith.cmpi eq, %arg1, %c0_i32_8 : i32
      %15 = arith.extui %14 : i1 to i32
      %c0_i32_9 = arith.constant 0 : i32
      %16 = arith.cmpi ne, %15, %c0_i32_9 : i32
      scf.if %16 {
        %cst_24 = arith.constant 0.000000e+00 : f32
        %40 = vector.broadcast %cst_24 : f32 to vector<1x128xf32>
        %c0_25 = arith.constant 0 : index
        %c0_26 = arith.constant 0 : index
        %41 = vector.load %arg10[%c0_25, %c0_26] : memref<1x128xf32, #tpu.memory_space<vmem>>, vector<1x128xf32>
        tpu.vector_store %arg10[%c0_25, %c0_26], %40 {strides = array<i32>} : memref<1x128xf32, #tpu.memory_space<vmem>>, vector<1x128xf32>,
        %cst_27 = arith.constant 0.000000e+00 : f32
        %42 = vector.broadcast %cst_27 : f32 to vector<1x128xf32>
        %c0_28 = arith.constant 0 : index
        %c0_29 = arith.constant 0 : index
        %43 = vector.load %arg11[%c0_28, %c0_29] : memref<1x128xf32, #tpu.memory_space<vmem>>, vector<1x128xf32>
        tpu.vector_store %arg11[%c0_28, %c0_29], %42 {strides = array<i32>} : memref<1x128xf32, #tpu.memory_space<vmem>>, vector<1x128xf32>,
      } else {
      }
      %c128_i32 = arith.constant 128 : i32
      %17 = arith.muli %arg1, %c128_i32 : i32
      %18 = tpu.iota {dimensions = array<i32: 0>} : vector<128x1xi32>
      %19 = vector.broadcast %17 : i32 to vector<128x1xi32>
      %20 = arith.addi %19, %18 : vector<128x1xi32>
      %c300_i32 = arith.constant 300 : i32
      %21 = vector.broadcast %c300_i32 : i32 to vector<128x1xi32>
      %22 = arith.cmpi slt, %20, %21 : vector<128x1xi32>
      %cst_10 = arith.constant 0.000000e+00 : f32
      %23 = vector.shape_cast %22 : vector<128x1xi1> to vector<128x1xi1>
      %24 = vector.broadcast %23 : vector<128x1xi1> to vector<128x128xi1>
      %25 = vector.broadcast %cst_10 : f32 to vector<128x128xf32>
      %26 = arith.select %24, %7, %25 : vector<128x128xi1>, vector<128x128xf32>
      %c0_11 = arith.constant 0 : index
      %c0_12 = arith.constant 0 : index
      %27 = vector.load %arg10[%c0_11, %c0_12] : memref<1x128xf32, #tpu.memory_space<vmem>>, vector<1x128xf32>
      %cst_13 = arith.constant dense<0.000000e+00> : vector<128xf32>
      %28 = vector.multi_reduction <add>, %26, %cst_13 [0] : vector<128x128xf32> to vector<128xf32>
      %29 = vector.shape_cast %28 : vector<128xf32> to vector<1x128xf32>
      %30 = arith.addf %27, %29 : vector<1x128xf32>
      %c0_14 = arith.constant 0 : index
      %c0_15 = arith.constant 0 : index
      %31 = vector.load %arg10[%c0_14, %c0_15] : memref<1x128xf32, #tpu.memory_space<vmem>>, vector<1x128xf32>
      tpu.vector_store %arg10[%c0_14, %c0_15], %30 {strides = array<i32>} : memref<1x128xf32, #tpu.memory_space<vmem>>, vector<1x128xf32>,
      %c0_16 = arith.constant 0 : index
      %c0_17 = arith.constant 0 : index
      %32 = vector.load %arg11[%c0_16, %c0_17] : memref<1x128xf32, #tpu.memory_space<vmem>>, vector<1x128xf32>
      %33 = arith.mulf %26, %26 : vector<128x128xf32>
      %cst_18 = arith.constant dense<0.000000e+00> : vector<128xf32>
      %34 = vector.multi_reduction <add>, %33, %cst_18 [0] : vector<128x128xf32> to vector<128xf32>
      %35 = vector.shape_cast %34 : vector<128xf32> to vector<1x128xf32>
      %36 = arith.addf %32, %35 : vector<1x128xf32>
      %c0_19 = arith.constant 0 : index
      %c0_20 = arith.constant 0 : index
      %37 = vector.load %arg11[%c0_19, %c0_20] : memref<1x128xf32, #tpu.memory_space<vmem>>, vector<1x128xf32>
      tpu.vector_store %arg11[%c0_19, %c0_20], %36 {strides = array<i32>} : memref<1x128xf32, #tpu.memory_space<vmem>>, vector<1x128xf32>,
      %cst_21 = arith.constant 0.000000e+00 : f32
      %38 = vector.broadcast %cst_21 : f32 to vector<128x1xf32>
      %c0_22 = arith.constant 0 : index
      %c0_23 = arith.constant 0 : index
      %39 = vector.load %arg9[%c0_22, %c0_23] : memref<128x1xf32, #tpu.memory_space<vmem>>, vector<128x1xf32>
      tpu.vector_store %arg9[%c0_22, %c0_23], %38 {strides = array<i32>} : memref<128x1xf32, #tpu.memory_space<vmem>>, vector<128x1xf32>,
    } else {
    }
    %c1_i32 = arith.constant 1 : i32
    %11 = arith.cmpi eq, %arg0, %c1_i32 : i32
    %12 = arith.extui %11 : i1 to i32
    %c0_i32_7 = arith.constant 0 : i32
    %13 = arith.cmpi ne, %12, %c0_i32_7 : i32
    scf.if %13 {
      %c0_i32_8 = arith.constant 0 : i32
      %14 = arith.cmpi eq, %arg1, %c0_i32_8 : i32
      %15 = arith.extui %14 : i1 to i32
      %c0_i32_9 = arith.constant 0 : i32
      %16 = arith.cmpi ne, %15, %c0_i32_9 : i32
      scf.if %16 {
        %c0_19 = arith.constant 0 : index
        %c0_20 = arith.constant 0 : index
        %29 = vector.load %arg10[%c0_19, %c0_20] : memref<1x128xf32, #tpu.memory_space<vmem>>, vector<1x128xf32>
        %cst_21 = arith.constant 0.00333333341 : f32
        %30 = vector.broadcast %cst_21 : f32 to vector<1x128xf32>
        %31 = arith.mulf %29, %30 : vector<1x128xf32>
        %c0_22 = arith.constant 0 : index
        %c0_23 = arith.constant 0 : index
        %32 = vector.load %arg11[%c0_22, %c0_23] : memref<1x128xf32, #tpu.memory_space<vmem>>, vector<1x128xf32>
        %cst_24 = arith.constant 0.00333333341 : f32
        %33 = vector.broadcast %cst_24 : f32 to vector<1x128xf32>
        %34 = arith.mulf %32, %33 : vector<1x128xf32>
        %35 = arith.mulf %31, %31 : vector<1x128xf32>
        %36 = arith.subf %34, %35 : vector<1x128xf32>
        %cst_25 = arith.constant 0.000000e+00 : f32
        %37 = vector.broadcast %cst_25 : f32 to vector<1x128xf32>
        %38 = arith.maximumf %36, %37 : vector<1x128xf32>
        %cst_26 = arith.constant 9.99999974E-6 : f32
        %39 = vector.broadcast %cst_26 : f32 to vector<1x128xf32>
        %40 = arith.addf %38, %39 : vector<1x128xf32>
        %41 = math.rsqrt %40 : vector<1x128xf32>
        %c0_27 = arith.constant 0 : index
        %c0_28 = arith.constant 0 : index
        %42 = vector.load %arg12[%c0_27, %c0_28] : memref<1x128xf32, #tpu.memory_space<vmem>>, vector<1x128xf32>
        tpu.vector_store %arg12[%c0_27, %c0_28], %31 {strides = array<i32>} : memref<1x128xf32, #tpu.memory_space<vmem>>, vector<1x128xf32>,
        %c0_29 = arith.constant 0 : index
        %c0_30 = arith.constant 0 : index
        %43 = vector.load %arg5[%c0_29, %c0_30] : memref<1x128xf32, #tpu.memory_space<vmem>>, vector<1x128xf32>
        %44 = arith.mulf %41, %43 : vector<1x128xf32>
        %c0_31 = arith.constant 0 : index
        %c0_32 = arith.constant 0 : index
        %45 = vector.load %arg7[%c0_31, %c0_32] : memref<1x128xf32, #tpu.memory_space<vmem>>, vector<1x128xf32>
        %46 = arith.mulf %44, %45 : vector<1x128xf32>
        %c0_33 = arith.constant 0 : index
        %c0_34 = arith.constant 0 : index
        %47 = vector.load %arg13[%c0_33, %c0_34] : memref<1x128xf32, #tpu.memory_space<vmem>>, vector<1x128xf32>
        tpu.vector_store %arg13[%c0_33, %c0_34], %46 {strides = array<i32>} : memref<1x128xf32, #tpu.memory_space<vmem>>, vector<1x128xf32>,
        %c0_35 = arith.constant 0 : index
        %c0_36 = arith.constant 0 : index
        %48 = vector.load %arg6[%c0_35, %c0_36] : memref<1x128xf32, #tpu.memory_space<vmem>>, vector<1x128xf32>
        %c0_37 = arith.constant 0 : index
        %c0_38 = arith.constant 0 : index
        %49 = vector.load %arg7[%c0_37, %c0_38] : memref<1x128xf32, #tpu.memory_space<vmem>>, vector<1x128xf32>
        %50 = arith.mulf %48, %49 : vector<1x128xf32>
        %cst_39 = arith.constant dense<0.000000e+00> : vector<1xf32>
        %51 = vector.multi_reduction <add>, %50, %cst_39 [1] : vector<1x128xf32> to vector<1xf32>
        %52 = vector.shape_cast %51 : vector<1xf32> to vector<1x1xf32>
        %c0_40 = arith.constant 0 : index
        %c0_41 = arith.constant 0 : index
        %53 = vector.load %arg8[%c0_40, %c0_41] : memref<1x1xf32, #tpu.memory_space<vmem>>, vector<1x1xf32>
        %54 = arith.addf %52, %53 : vector<1x1xf32>
        %c0_42 = arith.constant 0 : index
        %c0_43 = arith.constant 0 : index
        %55 = vector.load %arg14[%c0_42, %c0_43] : memref<1x1xf32, #tpu.memory_space<vmem>>, vector<1x1xf32>
        tpu.vector_store %arg14[%c0_42, %c0_43], %54 {strides = array<i32>} : memref<1x1xf32, #tpu.memory_space<vmem>>, vector<1x1xf32>,
      } else {
      }
      %c0_10 = arith.constant 0 : index
      %c0_11 = arith.constant 0 : index
      %17 = vector.load %arg12[%c0_10, %c0_11] : memref<1x128xf32, #tpu.memory_space<vmem>>, vector<1x128xf32>
      %18 = vector.broadcast %17 : vector<1x128xf32> to vector<128x128xf32>
      %19 = arith.subf %7, %18 : vector<128x128xf32>
      %c0_12 = arith.constant 0 : index
      %c0_13 = arith.constant 0 : index
      %20 = vector.load %arg13[%c0_12, %c0_13] : memref<1x128xf32, #tpu.memory_space<vmem>>, vector<1x128xf32>
      %21 = vector.broadcast %20 : vector<1x128xf32> to vector<128x128xf32>
      %22 = arith.mulf %19, %21 : vector<128x128xf32>
      %cst_14 = arith.constant dense<0.000000e+00> : vector<128xf32>
      %23 = vector.multi_reduction <add>, %22, %cst_14 [1] : vector<128x128xf32> to vector<128xf32>
      %24 = vector.shape_cast %23 : vector<128xf32> to vector<128x1xf32>
      %c0_15 = arith.constant 0 : index
      %c0_16 = arith.constant 0 : index
      %25 = vector.load %arg14[%c0_15, %c0_16] : memref<1x1xf32, #tpu.memory_space<vmem>>, vector<1x1xf32>
      %26 = vector.broadcast %25 : vector<1x1xf32> to vector<128x1xf32>
      %27 = arith.addf %24, %26 : vector<128x1xf32>
      %c0_17 = arith.constant 0 : index
      %c0_18 = arith.constant 0 : index
      %28 = vector.load %arg9[%c0_17, %c0_18] : memref<128x1xf32, #tpu.memory_space<vmem>>, vector<128x1xf32>
      tpu.vector_store %arg9[%c0_17, %c0_18], %27 {strides = array<i32>} : memref<128x1xf32, #tpu.memory_space<vmem>>, vector<128x1xf32>,
    } else {
    }
    return
  }
  func.func @transform_0(%arg0: i32, %arg1: i32) -> (i32, i32) {
    %c0_i32 = arith.constant 0 : i32
    %c0_i32_0 = arith.constant 0 : i32
    return %arg1, %c0_i32 : i32, i32
  }
  func.func @transform_1(%arg0: i32, %arg1: i32) -> (i32, i32) {
    %c0_i32 = arith.constant 0 : i32
    %c0_i32_0 = arith.constant 0 : i32
    %c0_i32_1 = arith.constant 0 : i32
    return %c0_i32, %c0_i32_0 : i32, i32
  }
  func.func @transform_2(%arg0: i32, %arg1: i32) -> (i32, i32) {
    %c0_i32 = arith.constant 0 : i32
    %c0_i32_0 = arith.constant 0 : i32
    %c0_i32_1 = arith.constant 0 : i32
    return %c0_i32, %c0_i32_0 : i32, i32
  }
  func.func @transform_3(%arg0: i32, %arg1: i32) -> (i32, i32) {
    %c0_i32 = arith.constant 0 : i32
    %c0_i32_0 = arith.constant 0 : i32
    %c0_i32_1 = arith.constant 0 : i32
    return %c0_i32, %c0_i32_0 : i32, i32
  }
  func.func @transform_4(%arg0: i32, %arg1: i32) -> (i32, i32) {
    %c0_i32 = arith.constant 0 : i32
    %c0_i32_0 = arith.constant 0 : i32
    %c0_i32_1 = arith.constant 0 : i32
    return %c0_i32, %c0_i32_0 : i32, i32
  }
  func.func @transform_5(%arg0: i32, %arg1: i32) -> (i32, i32) {
    %c0_i32 = arith.constant 0 : i32
    %c0_i32_0 = arith.constant 0 : i32
    %c0_i32_1 = arith.constant 0 : i32
    return %c0_i32, %c0_i32_0 : i32, i32
  }
  func.func @transform_6(%arg0: i32, %arg1: i32) -> (i32, i32) {
    %c0_i32 = arith.constant 0 : i32
    %c0_i32_0 = arith.constant 0 : i32
    %c0_i32_1 = arith.constant 0 : i32
    return %c0_i32, %c0_i32_0 : i32, i32
  }
  func.func @transform_7(%arg0: i32, %arg1: i32) -> (i32, i32) {
    %c0_i32 = arith.constant 0 : i32
    %c0_i32_0 = arith.constant 0 : i32
    return %arg1, %c0_i32 : i32, i32
  }
}

</mosaic_0001>

<llo_original>
// kernel: tpu_custom_call.1
$region0: #{tpu_custom_call.1}
  #allocation0 [shape = 'u32[]', space=smem, size = 0x4, offset = 0x4, fixed_abs, tag = 'smem constant byte address 0x4 - core index']
  #allocation1 [shape = 'u32[72,128]{1,0:T(1,128)}', space=vmem, size = 0x9000, scoped, tag = 'internal scratch']
  #allocation2 [shape = 'f32[1,128]{1,0:T(1,128)}', space=vmem, size = 0x200, scoped, tag = 'scratch operand']
  #allocation3 [shape = 'f32[1,128]{1,0:T(1,128)}', space=vmem, size = 0x200, scoped, tag = 'scratch operand']
  #allocation4 [shape = 'f32[1,128]{1,0:T(1,128)}', space=vmem, size = 0x200, scoped, tag = 'scratch operand']
  #allocation5 [shape = 'f32[1,128]{1,0:T(1,128)}', space=vmem, size = 0x200, scoped, tag = 'scratch operand']
  #allocation6 [shape = 'f32[1,1]{1,0:T(1,128)}', space=vmem, size = 0x200, scoped, tag = 'scratch operand']
  #allocation7 [shape = 'f32[1,1]{1,0:T(1,128)S(1)}', space=vmem, size = 0x200, scoped, tag = 'scoped memory for tpu_custom_call.1']
  %s0 = inlined_call_operand.vmem [shape: f32[384,64], index: 0, kind: input, shape index: {}]
  %s1 = inlined_call_operand.vmem [shape: f32[64,128], index: 1, kind: input, shape index: {}]
  %s2 = inlined_call_operand.vmem [shape: f32[1,128], index: 2, kind: input, shape index: {}]
  %s3 = inlined_call_operand.vmem [shape: f32[1,128], index: 3, kind: input, shape index: {}]
  %s4 = inlined_call_operand.vmem [shape: f32[1,128], index: 4, kind: input, shape index: {}]
  %s5 = inlined_call_operand.vmem [shape: f32[1,128], index: 5, kind: input, shape index: {}]
  %s6 = inlined_call_operand.<no memory space> [shape: f32[1,1], index: 6, kind: input, shape index: {}]
  %s7 = inlined_call_operand.vmem [shape: f32[384,1], index: 7, kind: output, shape index: {}]
  %s8 = sld [smem:[#allocation0]]
  $region77: #{tpu_custom_call.1} parent=0
    _
  %s10 = ssub.s32 1, %s8
  %s11 = scalar_select 0, %s10, %s8
  %v12 = vstv %s6
  %13 = vst [vmem:[#allocation7] sm:$0x1] %v12
  loop: start=0, step=1, limit=8
  $region2: #{tpu_custom_call.1} parent=0 // loop_pre_header
    _
  $region3: #{tpu_custom_call.1} parent=0 // loop_header
    %s15 = sphi 0, %s19
    %p16 = scmp.ge.s32.totalorder %s15, 8
    %s22 = sphi 0, %s34
    %s23 = sphi 0, %s30
    %s24 = sphi 0, %s22
    %s25 = sphi 0, %s23
    %s26 = sphi 0, %s24
    %s27 = sphi 0, %s25
    %s37 = sphi 0, %s39
    %s40 = sphi 0, %s37
    %s41 = sphi 0, %s40
    %s57 = sphi 0, %s41
    %s61 = sphi 0, %s61
    %s63 = sphi 0, %s61
    %s64 = sphi 0, %s63
    %s78 = sphi 0, %s64
    %s82 = sphi 0, %s82
    %s84 = sphi 0, %s82
    %s85 = sphi 0, %s84
    %s99 = sphi 0, %s85
    %s103 = sphi 0, %s103
    %s105 = sphi 0, %s103
    %s106 = sphi 0, %s105
    %s120 = sphi 0, %s106
    %s124 = sphi 0, %s124
    %s126 = sphi 0, %s124
    %s127 = sphi 0, %s126
    %s141 = sphi 0, %s127
    %s145 = sphi 0, %s145
    %s147 = sphi 0, %s145
    %s148 = sphi 0, %s147
    %s162 = sphi 0, %s148
    %s166 = sphi 0, %s166
    %s168 = sphi 0, %s166
    %s169 = sphi 0, %s168
    %s183 = sphi 0, %s169
    %s189 = sphi 0, %s191
    %s192 = sphi 0, %s189
    %s193 = sphi 0, %s192
    %s209 = sphi 0, %s193
  $region4: #{tpu_custom_call.1} parent=0 // loop_header_branch
    %18 = sbr.rel (%p16) target = $region8
  $region5: #{tpu_custom_call.1} parent=0 // loop_body
    %s20 = ssub.s32 %s15, 1
    %s21 = ssub.s32 %s15, 2
    %s28 = sadd.s32 1, %s23
    %p29 = scmp.ge.s32.totalorder %s28, 3
    %s30 = scalar_select %p29, 0, %s28
    %s31 = sadd.s32 1, %s22
    %s32 = scalar_select %p29, %s31, %s22
    %p33 = scmp.ge.s32.totalorder %s32, 2
    %s34 = scalar_select %p33, 0, %s32
    %s35 = ssub.s32 %s23, %s30
    %p36 = scmp.eq.s32.totalorder %s35, 0
    %s38 = sadd.s32 %s37, 1
    %s39 = scalar_select %p36, %s37, %s38
    %p42 = pneg %p36
    %p43 = scmp.eq.s32.totalorder %s15, 5
    %p44 = por %p42, %p43
    %p45 = scmp.ne.s32.totalorder %s37, %s40
    %p46 = scmp.eq.s32.totalorder %s15, 0
    %p47 = por %p45, %p46
    %p48 = scmp.ne.s32.totalorder %s37, %s40
    %p49 = scmp.eq.s32.totalorder %s20, 5
    %p50 = por %p48, %p49
    %p51 = scmp.ne.s32.totalorder %s40, %s41
    %p52 = scmp.eq.s32.totalorder %s20, 0
    %p53 = por %p51, %p52
    %p54 = scmp.ne.s32.totalorder %s40, %s41
    %p55 = scmp.eq.s32.totalorder %s21, 5
    %p56 = por %p54, %p55
    %p58 = scmp.ne.s32.totalorder %s41, %s57
    %p59 = scmp.eq.s32.totalorder %s21, 0
    %p60 = por %p58, %p59
    %s62 = sadd.s32 %s61, 1
    %p65 = scmp.eq.s32.totalorder %s15, 5
    %p66 = scmp.ne.s32.totalorder %s61, %s63
    %p67 = scmp.eq.s32.totalorder %s15, 0
    %p68 = por %p66, %p67
    %p69 = scmp.ne.s32.totalorder %s61, %s63
    %p70 = scmp.eq.s32.totalorder %s20, 5
    %p71 = por %p69, %p70
    %p72 = scmp.ne.s32.totalorder %s63, %s64
    %p73 = scmp.eq.s32.totalorder %s20, 0
    %p74 = por %p72, %p73
    %p75 = scmp.ne.s32.totalorder %s63, %s64
    %p76 = scmp.eq.s32.totalorder %s21, 5
    %p77 = por %p75, %p76
    %p79 = scmp.ne.s32.totalorder %s64, %s78
    %p80 = scmp.eq.s32.totalorder %s21, 0
    %p81 = por %p79, %p80
    %s83 = sadd.s32 %s82, 1
    %p86 = scmp.eq.s32.totalorder %s15, 5
    %p87 = scmp.ne.s32.totalorder %s82, %s84
    %p88 = scmp.eq.s32.totalorder %s15, 0
    %p89 = por %p87, %p88
    %p90 = scmp.ne.s32.totalorder %s82, %s84
    %p91 = scmp.eq.s32.totalorder %s20, 5
    %p92 = por %p90, %p91
    %p93 = scmp.ne.s32.totalorder %s84, %s85
    %p94 = scmp.eq.s32.totalorder %s20, 0
    %p95 = por %p93, %p94
    %p96 = scmp.ne.s32.totalorder %s84, %s85
    %p97 = scmp.eq.s32.totalorder %s21, 5
    %p98 = por %p96, %p97
    %p100 = scmp.ne.s32.totalorder %s85, %s99
    %p101 = scmp.eq.s32.totalorder %s21, 0
    %p102 = por %p100, %p101
    %s104 = sadd.s32 %s103, 1
    %p107 = scmp.eq.s32.totalorder %s15, 5
    %p108 = scmp.ne.s32.totalorder %s103, %s105
    %p109 = scmp.eq.s32.totalorder %s15, 0
    %p110 = por %p108, %p109
    %p111 = scmp.ne.s32.totalorder %s103, %s105
    %p112 = scmp.eq.s32.totalorder %s20, 5
    %p113 = por %p111, %p112
    %p114 = scmp.ne.s32.totalorder %s105, %s106
    %p115 = scmp.eq.s32.totalorder %s20, 0
    %p116 = por %p114, %p115
    %p117 = scmp.ne.s32.totalorder %s105, %s106
    %p118 = scmp.eq.s32.totalorder %s21, 5
    %p119 = por %p117, %p118
    %p121 = scmp.ne.s32.totalorder %s106, %s120
    %p122 = scmp.eq.s32.totalorder %s21, 0
    %p123 = por %p121, %p122
    %s125 = sadd.s32 %s124, 1
    %p128 = scmp.eq.s32.totalorder %s15, 5
    %p129 = scmp.ne.s32.totalorder %s124, %s126
    %p130 = scmp.eq.s32.totalorder %s15, 0
    %p131 = por %p129, %p130
    %p132 = scmp.ne.s32.totalorder %s124, %s126
    %p133 = scmp.eq.s32.totalorder %s20, 5
    %p134 = por %p132, %p133
    %p135 = scmp.ne.s32.totalorder %s126, %s127
    %p136 = scmp.eq.s32.totalorder %s20, 0
    %p137 = por %p135, %p136
    %p138 = scmp.ne.s32.totalorder %s126, %s127
    %p139 = scmp.eq.s32.totalorder %s21, 5
    %p140 = por %p138, %p139
    %p142 = scmp.ne.s32.totalorder %s127, %s141
    %p143 = scmp.eq.s32.totalorder %s21, 0
    %p144 = por %p142, %p143
    %s146 = sadd.s32 %s145, 1
    %p149 = scmp.eq.s32.totalorder %s15, 5
    %p150 = scmp.ne.s32.totalorder %s145, %s147
    %p151 = scmp.eq.s32.totalorder %s15, 0
    %p152 = por %p150, %p151
    %p153 = scmp.ne.s32.totalorder %s145, %s147
    %p154 = scmp.eq.s32.totalorder %s20, 5
    %p155 = por %p153, %p154
    %p156 = scmp.ne.s32.totalorder %s147, %s148
    %p157 = scmp.eq.s32.totalorder %s20, 0
    %p158 = por %p156, %p157
    %p159 = scmp.ne.s32.totalorder %s147, %s148
    %p160 = scmp.eq.s32.totalorder %s21, 5
    %p161 = por %p159, %p160
    %p163 = scmp.ne.s32.totalorder %s148, %s162
    %p164 = scmp.eq.s32.totalorder %s21, 0
    %p165 = por %p163, %p164
    %s167 = sadd.s32 %s166, 1
    %p170 = scmp.eq.s32.totalorder %s15, 5
    %p171 = scmp.ne.s32.totalorder %s166, %s168
    %p172 = scmp.eq.s32.totalorder %s15, 0
    %p173 = por %p171, %p172
    %p174 = scmp.ne.s32.totalorder %s166, %s168
    %p175 = scmp.eq.s32.totalorder %s20, 5
    %p176 = por %p174, %p175
    %p177 = scmp.ne.s32.totalorder %s168, %s169
    %p178 = scmp.eq.s32.totalorder %s20, 0
    %p179 = por %p177, %p178
    %p180 = scmp.ne.s32.totalorder %s168, %s169
    %p181 = scmp.eq.s32.totalorder %s21, 5
    %p182 = por %p180, %p181
    %p184 = scmp.ne.s32.totalorder %s169, %s183
    %p185 = scmp.eq.s32.totalorder %s21, 0
    %p186 = por %p184, %p185
    %s187 = ssub.s32 %s23, %s30
    %p188 = scmp.eq.s32.totalorder %s187, 0
    %s190 = sadd.s32 %s189, 1
    %s191 = scalar_select %p188, %s189, %s190
    %p194 = pneg %p188
    %p195 = scmp.eq.s32.totalorder %s15, 5
    %p196 = por %p194, %p195
    %p197 = scmp.ne.s32.totalorder %s189, %s192
    %p198 = scmp.eq.s32.totalorder %s15, 0
    %p199 = por %p197, %p198
    %p200 = scmp.ne.s32.totalorder %s189, %s192
    %p201 = scmp.eq.s32.totalorder %s20, 5
    %p202 = por %p200, %p201
    %p203 = scmp.ne.s32.totalorder %s192, %s193
    %p204 = scmp.eq.s32.totalorder %s20, 0
    %p205 = por %p203, %p204
    %p206 = scmp.ne.s32.totalorder %s192, %s193
    %p207 = scmp.eq.s32.totalorder %s21, 5
    %p208 = por %p206, %p207
    %p210 = scmp.ne.s32.totalorder %s193, %s209
    %p211 = scmp.eq.s32.totalorder %s21, 0
    %p212 = por %p210, %p211
    %p213 = scmp.le.s32.totalorder 1, %s15
    %p214 = scmp.lt.s32.totalorder %s15, 7
    %p215 = pnand %p213, %p214
    %p216 = pneg %p215
    // Predicated region
    $region9: #{tpu_custom_call.1} parent=5 // pred_check
      _
    $region10: #{tpu_custom_call.1} parent=5 // pred_check_branch
      %218 = sbr.rel (%p215) target = $region12
    $region11: #{tpu_custom_call.1} parent=5 // pred_region
      %s219 = ssub.s32 %s15, 1
      // Predicated region
      $region13: #{tpu_custom_call.1} parent=11 // pred_check
        %p220 = pneg %p74
      $region14: #{tpu_custom_call.1} parent=11 // pred_check_branch
        %222 = sbr.rel (%p220) target = $region16
      $region15: #{tpu_custom_call.1} parent=11 // pred_region
        _
      $region16: #{tpu_custom_call.1} parent=11 // pred_fallthru
        _
      // Predicated region
      $region17: #{tpu_custom_call.1} parent=11 // pred_check
        %p223 = pneg %p95
      $region18: #{tpu_custom_call.1} parent=11 // pred_check_branch
        %225 = sbr.rel (%p223) target = $region20
      $region19: #{tpu_custom_call.1} parent=11 // pred_region
        _
      $region20: #{tpu_custom_call.1} parent=11 // pred_fallthru
        _
      // Predicated region
      $region21: #{tpu_custom_call.1} parent=11 // pred_check
        %p226 = pneg %p116
      $region22: #{tpu_custom_call.1} parent=11 // pred_check_branch
        %228 = sbr.rel (%p226) target = $region24
      $region23: #{tpu_custom_call.1} parent=11 // pred_region
        _
      $region24: #{tpu_custom_call.1} parent=11 // pred_fallthru
        _
      // Predicated region
      $region25: #{tpu_custom_call.1} parent=11 // pred_check
        %p229 = pneg %p137
      $region26: #{tpu_custom_call.1} parent=11 // pred_check_branch
        %231 = sbr.rel (%p229) target = $region28
      $region27: #{tpu_custom_call.1} parent=11 // pred_region
        _
      $region28: #{tpu_custom_call.1} parent=11 // pred_fallthru
        _
      // Predicated region
      $region29: #{tpu_custom_call.1} parent=11 // pred_check
        %p232 = pneg %p158
      $region30: #{tpu_custom_call.1} parent=11 // pred_check_branch
        %234 = sbr.rel (%p232) target = $region32
      $region31: #{tpu_custom_call.1} parent=11 // pred_region
        _
      $region32: #{tpu_custom_call.1} parent=11 // pred_fallthru
        _
      // Predicated region
      $region33: #{tpu_custom_call.1} parent=11 // pred_check
        %p235 = pneg %p179
      $region34: #{tpu_custom_call.1} parent=11 // pred_check_branch
        %237 = sbr.rel (%p235) target = $region36
      $region35: #{tpu_custom_call.1} parent=11 // pred_region
        _
      $region36: #{tpu_custom_call.1} parent=11 // pred_fallthru
        _
    $region12: #{tpu_custom_call.1} parent=5 // pred_fallthru
      _
    %p238 = scmp.lt.s32.totalorder %s15, 6
    // Predicated region
    $region37: #{tpu_custom_call.1} parent=5 // pred_check
      %p239 = pneg %p238
    $region38: #{tpu_custom_call.1} parent=5 // pred_check_branch
      %241 = sbr.rel (%p239) target = $region40
    $region39: #{tpu_custom_call.1} parent=5 // pred_region
      // Predicated region
      $region41: #{tpu_custom_call.1} parent=39 // pred_check
        %p242 = pneg %p47
      $region42: #{tpu_custom_call.1} parent=39 // pred_check_branch
        %244 = sbr.rel (%p242) target = $region44
      $region43: #{tpu_custom_call.1} parent=39 // pred_region
        %s245 = smul.u32 16, %s23
        %p246 = scmp.lt.s32.totalorder %s245, 47
        %s247 = scalar_select %p246, %s245, 47
        %s248 = smul.addr %s247, 8
        %s249 = scalar_lea.vmem %s0, %s248
        %s250 = smul.u32 16, %s23
      $region44: #{tpu_custom_call.1} parent=39 // pred_fallthru
        _
    $region40: #{tpu_custom_call.1} parent=5 // pred_fallthru
      _
    %p251 = scmp.le.s32.totalorder 1, %s15
    %p252 = scmp.lt.s32.totalorder %s15, 7
    %p253 = pnand %p251, %p252
    %p254 = pneg %p253
    // Predicated region
    $region45: #{tpu_custom_call.1} parent=5 // pred_check
      _
    $region46: #{tpu_custom_call.1} parent=5 // pred_check_branch
      %256 = sbr.rel (%p253) target = $region48
    $region47: #{tpu_custom_call.1} parent=5 // pred_region
      %s257 = ssub.s32 %s15, 1
      %s258 = smul.u32 16, %s25
      %p259 = scmp.lt.s32.totalorder %s258, 47
      %s260 = scalar_select %p259, %s258, 47
      %s261 = smul.addr %s260, 8
      %s262 = scalar_lea.vmem %s0, %s261
      %p263 = pneg %p53
      %p264 = pneg %p50
      %p265 = pneg %p74
      %p266 = pneg %p71
      %p267 = pneg %p95
      %p268 = pneg %p92
      %p269 = pneg %p116
      %p270 = pneg %p113
      %p271 = pneg %p137
      %p272 = pneg %p134
      %p273 = pneg %p158
      %p274 = pneg %p155
      %p275 = pneg %p179
      %p276 = pneg %p176
      %p277 = pneg %p205
      %p278 = pneg %p202
      %s279 = smul.u32 16, %s25
      %p280 = scmp.lt.s32.totalorder %s279, 47
      %s281 = scalar_select %p280, %s279, 47
      %s282 = smul.addr %s281, 8
      %s283 = scalar_lea.vmem %s7, %s282
      %s284 = smul.u32 16, %s25
      %p285 = scmp.lt.s32.totalorder %s284, 47
      %s286 = scalar_select %p285, %s284, 47
      %s287 = smul.addr %s286, 8
      %s288 = scalar_lea.vmem %s0, %s287
      %s289 = smul.u32 16, %s25
      %s290 = smul.u32 16, %s25
      %p291 = scmp.lt.s32.totalorder %s290, 47
      %s292 = scalar_select %p291, %s290, 47
      %s293 = smul.addr %s292, 8
      %s294 = scalar_lea.vmem %s7, %s293
      %s295 = smul.u32 16, %s25
      %v296 = vld [vmem:[%s288] sm:$0xff]
      %v297 = vld [vmem:[%s288 + $0x8] sm:$0xff]
      %v298 = vld [vmem:[%s288 + $0x10] sm:$0xff]
      %v299 = vld [vmem:[%s288 + $0x18] sm:$0xff]
      %v300 = vld [vmem:[%s288 + $0x20] sm:$0xff]
      %v301 = vld [vmem:[%s288 + $0x28] sm:$0xff]
      %v302 = vld [vmem:[%s288 + $0x30] sm:$0xff]
      %v303 = vld [vmem:[%s288 + $0x38] sm:$0xff]
      %v304 = vld [vmem:[%s288 + $0x40] sm:$0xff]
      %v305 = vld [vmem:[%s288 + $0x48] sm:$0xff]
      %v306 = vld [vmem:[%s288 + $0x50] sm:$0xff]
      %v307 = vld [vmem:[%s288 + $0x58] sm:$0xff]
      %v308 = vld [vmem:[%s288 + $0x60] sm:$0xff]
      %v309 = vld [vmem:[%s288 + $0x68] sm:$0xff]
      %v310 = vld [vmem:[%s288 + $0x70] sm:$0xff]
      %v311 = vld [vmem:[%s288 + $0x78] sm:$0xff]
      %v312 = vld [vmem:[%s1] sm:$0xff]
      %v313 = vld [vmem:[%s1 + $0x8] sm:$0xff]
      %v314 = vld [vmem:[%s1 + $0x10] sm:$0xff]
      %v315 = vld [vmem:[%s1 + $0x18] sm:$0xff]
      %v316 = vld [vmem:[%s1 + $0x20] sm:$0xff]
      %v317 = vld [vmem:[%s1 + $0x28] sm:$0xff]
      %v318 = vld [vmem:[%s1 + $0x30] sm:$0xff]
      %v319 = vld [vmem:[%s1 + $0x38] sm:$0xff]
      %v320 = vld [vmem:[%s2] sm:$0x1]
      %v322 = vperm.slane %v320, 0
      %vm324 = vcmask 523264
      %v326 = vsel %vm324, %v296, 0
      %v329 = vsel %vm324, %v297, 0
      %v332 = vsel %vm324, %v298, 0
      %v335 = vsel %vm324, %v299, 0
      %v338 = vsel %vm324, %v300, 0
      %v341 = vsel %vm324, %v301, 0
      %v344 = vsel %vm324, %v302, 0
      %v347 = vsel %vm324, %v303, 0
      %v350 = vsel %vm324, %v304, 0
      %v353 = vsel %vm324, %v305, 0
      %v356 = vsel %vm324, %v306, 0
      %v359 = vsel %vm324, %v307, 0
      %v362 = vsel %vm324, %v308, 0
      %v365 = vsel %vm324, %v309, 0
      %v368 = vsel %vm324, %v310, 0
      %v371 = vsel %vm324, %v311, 0
      %373 = vmatpush.msra.mxu0 0.0
      %374 = vmatpush.msra.mxu0 0.0
      %375 = vmatpush.msra.mxu0 0.0
      %376 = vmatpush.msra.mxu0 0.0
      %377 = vmatpush.msra.mxu0 0.0
      %378 = vmatpush.msra.mxu0 0.0
      %379 = vmatpush.msra.mxu0 0.0
      %380 = vmatpush.msra.mxu0 0.0
      %381 = vmatpush.msra.mxu0 %v319
      %382 = vmatpush.msra.mxu0 %v318
      %383 = vmatpush.msra.mxu0 %v317
      %384 = vmatpush.msra.mxu0 %v316
      %385 = vmatpush.msra.mxu0 %v315
      %386 = vmatpush.msra.mxu0 %v314
      %387 = vmatpush.msra.mxu0 %v313
      %388 = vmatpush.msra.mxu0 %v312
      %389 = vmatmul.f32.gmra.mxu0 %v326
      %v390 = vpop.f32.mrf.mxu0
      %v391 = vadd.f32 %v322, %v390
      %392 = vmatmul.f32.gmra.mxu0 %v329
      %v393 = vpop.f32.mrf.mxu0
      %v394 = vadd.f32 %v322, %v393
      %395 = vmatmul.f32.gmra.mxu0 %v332
      %v396 = vpop.f32.mrf.mxu0
      %v397 = vadd.f32 %v322, %v396
      %398 = vmatmul.f32.gmra.mxu0 %v335
      %v399 = vpop.f32.mrf.mxu0
      %v400 = vadd.f32 %v322, %v399
      %401 = vmatmul.f32.gmra.mxu0 %v338
      %v402 = vpop.f32.mrf.mxu0
      %v403 = vadd.f32 %v322, %v402
      %404 = vmatmul.f32.gmra.mxu0 %v341
      %v405 = vpop.f32.mrf.mxu0
      %v406 = vadd.f32 %v322, %v405
      %407 = vmatmul.f32.gmra.mxu0 %v344
      %v408 = vpop.f32.mrf.mxu0
      %v409 = vadd.f32 %v322, %v408
      %410 = vmatmul.f32.gmra.mxu0 %v347
      %v411 = vpop.f32.mrf.mxu0
      %v412 = vadd.f32 %v322, %v411
      %413 = vmatmul.f32.gmra.mxu0 %v350
      %v414 = vpop.f32.mrf.mxu0
      %v415 = vadd.f32 %v322, %v414
      %416 = vmatmul.f32.gmra.mxu0 %v353
      %v417 = vpop.f32.mrf.mxu0
      %v418 = vadd.f32 %v322, %v417
      %419 = vmatmul.f32.gmra.mxu0 %v356
      %v420 = vpop.f32.mrf.mxu0
      %v421 = vadd.f32 %v322, %v420
      %422 = vmatmul.f32.gmra.mxu0 %v359
      %v423 = vpop.f32.mrf.mxu0
      %v424 = vadd.f32 %v322, %v423
      %425 = vmatmul.f32.gmra.mxu0 %v362
      %v426 = vpop.f32.mrf.mxu0
      %v427 = vadd.f32 %v322, %v426
      %428 = vmatmul.f32.gmra.mxu0 %v365
      %v429 = vpop.f32.mrf.mxu0
      %v430 = vadd.f32 %v322, %v429
      %431 = vmatmul.f32.gmra.mxu0 %v368
      %v432 = vpop.f32.mrf.mxu0
      %v433 = vadd.f32 %v322, %v432
      %434 = vmatmul.f32.gmra.mxu0 %v371
      %v435 = vpop.f32.mrf.mxu0
      %v436 = vadd.f32 %v322, %v435
      %437 = vdwg.mxu0
      %v438 = vmax.f32 %v391, 0.0
      %v439 = vmax.f32 %v394, 0.0
      %v440 = vmax.f32 %v397, 0.0
      %v441 = vmax.f32 %v400, 0.0
      %v442 = vmax.f32 %v403, 0.0
      %v443 = vmax.f32 %v406, 0.0
      %v444 = vmax.f32 %v409, 0.0
      %v445 = vmax.f32 %v412, 0.0
      %v446 = vmax.f32 %v415, 0.0
      %v447 = vmax.f32 %v418, 0.0
      %v448 = vmax.f32 %v421, 0.0
      %v449 = vmax.f32 %v424, 0.0
      %v450 = vmax.f32 %v427, 0.0
      %v451 = vmax.f32 %v430, 0.0
      %v452 = vmax.f32 %v433, 0.0
      %v453 = vmax.f32 %v436, 0.0
      %p454 = scmp.eq.s32.totalorder %s24, 0
      // Predicated region
      $region49: #{tpu_custom_call.1} parent=47 // pred_check
        %p455 = pneg %p454
      $region50: #{tpu_custom_call.1} parent=47 // pred_check_branch
        %457 = sbr.rel (%p455) target = $region52
      $region51: #{tpu_custom_call.1} parent=47 // pred_region
        %p458 = scmp.eq.s32.totalorder %s25, 0
        // Predicated region
        $region53: #{tpu_custom_call.1} parent=51 // pred_check
          %p459 = pneg %p458
        $region54: #{tpu_custom_call.1} parent=51 // pred_check_branch
          %461 = sbr.rel (%p459) target = $region56
        $region55: #{tpu_custom_call.1} parent=51 // pred_region
          %462 = vst [vmem:[#allocation2] sm:$0x1] 0.0
          %463 = vst [vmem:[#allocation3] sm:$0x1] 0.0
        $region56: #{tpu_custom_call.1} parent=51 // pred_fallthru
          _
        %s464 = smul.u32 %s25, 128
        %v465 = vlaneseq
        %v466 = vshrl.u32 %v465, 7
        %v467 = vadd.s32 %v466, 8
        %v468 = vadd.s32 %v466, 16
        %v469 = vadd.s32 %v466, 24
        %v470 = vadd.s32 %v466, 32
        %v471 = vadd.s32 %v466, 40
        %v472 = vadd.s32 %v466, 48
        %v473 = vadd.s32 %v466, 56
        %v474 = vadd.s32 %v466, 64
        %v475 = vadd.s32 %v466, 72
        %v476 = vadd.s32 %v466, 80
        %v477 = vadd.s32 %v466, 88
        %v478 = vadd.s32 %v466, 96
        %v479 = vadd.s32 %v466, 104
        %v480 = vadd.s32 %v466, 112
        %v481 = vadd.s32 %v466, 120
        %v482 = vstv %s464
        %v483 = vadd.s32 %v482, %v466
        %v484 = vadd.s32 %v482, %v467
        %v485 = vadd.s32 %v482, %v468
        %v486 = vadd.s32 %v482, %v469
        %v487 = vadd.s32 %v482, %v470
        %v488 = vadd.s32 %v482, %v471
        %v489 = vadd.s32 %v482, %v472
        %v490 = vadd.s32 %v482, %v473
        %v491 = vadd.s32 %v482, %v474
        %v492 = vadd.s32 %v482, %v475
        %v493 = vadd.s32 %v482, %v476
        %v494 = vadd.s32 %v482, %v477
        %v495 = vadd.s32 %v482, %v478
        %v496 = vadd.s32 %v482, %v479
        %v497 = vadd.s32 %v482, %v480
        %v498 = vadd.s32 %v482, %v481
        %vm499 = vcmp.lt.s32.totalorder %v483, 300
        %vm500 = vcmp.lt.s32.totalorder %v484, 300
        %vm501 = vcmp.lt.s32.totalorder %v485, 300
        %vm502 = vcmp.lt.s32.totalorder %v486, 300
        %vm503 = vcmp.lt.s32.totalorder %v487, 300
        %vm504 = vcmp.lt.s32.totalorder %v488, 300
        %vm505 = vcmp.lt.s32.totalorder %v489, 300
        %vm506 = vcmp.lt.s32.totalorder %v490, 300
        %vm507 = vcmp.lt.s32.totalorder %v491, 300
        %vm508 = vcmp.lt.s32.totalorder %v492, 300
        %vm509 = vcmp.lt.s32.totalorder %v493, 300
        %vm510 = vcmp.lt.s32.totalorder %v494, 300
        %vm511 = vcmp.lt.s32.totalorder %v495, 300
        %vm512 = vcmp.lt.s32.totalorder %v496, 300
        %vm513 = vcmp.lt.s32.totalorder %v497, 300
        %vm514 = vcmp.lt.s32.totalorder %v498, 300
        %v515 = vsel %vm499, 1, 0
        %v516 = vsel %vm500, 1, 0
        %v517 = vsel %vm501, 1, 0
        %v518 = vsel %vm502, 1, 0
        %v519 = vsel %vm503, 1, 0
        %v520 = vsel %vm504, 1, 0
        %v521 = vsel %vm505, 1, 0
        %v522 = vsel %vm506, 1, 0
        %v523 = vsel %vm507, 1, 0
        %v524 = vsel %vm508, 1, 0
        %v525 = vsel %vm509, 1, 0
        %v526 = vsel %vm510, 1, 0
        %v527 = vsel %vm511, 1, 0
        %v528 = vsel %vm512, 1, 0
        %v529 = vsel %vm513, 1, 0
        %v530 = vsel %vm514, 1, 0
        %vm531 = vcmp.eq.s32.totalorder %v515, 1
        %vm532 = vcmp.eq.s32.totalorder %v516, 1
        %vm533 = vcmp.eq.s32.totalorder %v517, 1
        %vm534 = vcmp.eq.s32.totalorder %v518, 1
        %vm535 = vcmp.eq.s32.totalorder %v519, 1
        %vm536 = vcmp.eq.s32.totalorder %v520, 1
        %vm537 = vcmp.eq.s32.totalorder %v521, 1
        %vm538 = vcmp.eq.s32.totalorder %v522, 1
        %vm539 = vcmp.eq.s32.totalorder %v523, 1
        %vm540 = vcmp.eq.s32.totalorder %v524, 1
        %vm541 = vcmp.eq.s32.totalorder %v525, 1
        %vm542 = vcmp.eq.s32.totalorder %v526, 1
        %vm543 = vcmp.eq.s32.totalorder %v527, 1
        %vm544 = vcmp.eq.s32.totalorder %v528, 1
        %vm545 = vcmp.eq.s32.totalorder %v529, 1
        %vm546 = vcmp.eq.s32.totalorder %v530, 1
        %v547 = vsel %vm531, %v438, 0.0
        %v548 = vsel %vm532, %v439, 0.0
        %v549 = vsel %vm533, %v440, 0.0
        %v550 = vsel %vm534, %v441, 0.0
        %v551 = vsel %vm535, %v442, 0.0
        %v552 = vsel %vm536, %v443, 0.0
        %v553 = vsel %vm537, %v444, 0.0
        %v554 = vsel %vm538, %v445, 0.0
        %v555 = vsel %vm539, %v446, 0.0
        %v556 = vsel %vm540, %v447, 0.0
        %v557 = vsel %vm541, %v448, 0.0
        %v558 = vsel %vm542, %v449, 0.0
        %v559 = vsel %vm543, %v450, 0.0
        %v560 = vsel %vm544, %v451, 0.0
        %v561 = vsel %vm545, %v452, 0.0
        %v562 = vsel %vm546, %v453, 0.0
        %v563 = vld [vmem:[#allocation2] sm:$0x1]
        %v564 = vadd.f32 %v547, %v548
        %v565 = vadd.f32 %v564, %v549
        %v566 = vadd.f32 %v565, %v550
        %v567 = vadd.f32 %v566, %v551
        %v568 = vadd.f32 %v567, %v552
        %v569 = vadd.f32 %v568, %v553
        %v570 = vadd.f32 %v569, %v554
        %v571 = vadd.f32 %v570, %v555
        %v572 = vadd.f32 %v571, %v556
        %v573 = vadd.f32 %v572, %v557
        %v574 = vadd.f32 %v573, %v558
        %v575 = vadd.f32 %v574, %v559
        %v576 = vadd.f32 %v575, %v560
        %v577 = vadd.f32 %v576, %v561
        %v578 = vadd.f32 %v577, %v562
        %v579 = vrot.slane %v578, 4
        %v580 = vadd.f32 %v578, %v579
        %v581 = vrot.slane %v580, 2
        %v582 = vadd.f32 %v580, %v581
        %v583 = vrot.slane %v582, 1
        %v584 = vadd.f32 %v582, %v583
        %v585 = vadd.f32 %v563, %v584
        %586 = vst [vmem:[#allocation2] sm:$0x1] %v585
        %v587 = vld [vmem:[#allocation3] sm:$0x1]
        %v588 = vmul.f32 %v547, %v547
        %v589 = vmul.f32 %v548, %v548
        %v590 = vmul.f32 %v549, %v549
        %v591 = vmul.f32 %v550, %v550
        %v592 = vmul.f32 %v551, %v551
        %v593 = vmul.f32 %v552, %v552
        %v594 = vmul.f32 %v553, %v553
        %v595 = vmul.f32 %v554, %v554
        %v596 = vmul.f32 %v555, %v555
        %v597 = vmul.f32 %v556, %v556
        %v598 = vmul.f32 %v557, %v557
        %v599 = vmul.f32 %v558, %v558
        %v600 = vmul.f32 %v559, %v559
        %v601 = vmul.f32 %v560, %v560
        %v602 = vmul.f32 %v561, %v561
        %v603 = vmul.f32 %v562, %v562
        %v604 = vadd.f32 %v588, %v589
        %v605 = vadd.f32 %v604, %v590
        %v606 = vadd.f32 %v605, %v591
        %v607 = vadd.f32 %v606, %v592
        %v608 = vadd.f32 %v607, %v593
        %v609 = vadd.f32 %v608, %v594
        %v610 = vadd.f32 %v609, %v595
        %v611 = vadd.f32 %v610, %v596
        %v612 = vadd.f32 %v611, %v597
        %v613 = vadd.f32 %v612, %v598
        %v614 = vadd.f32 %v613, %v599
        %v615 = vadd.f32 %v614, %v600
        %v616 = vadd.f32 %v615, %v601
        %v617 = vadd.f32 %v616, %v602
        %v618 = vadd.f32 %v617, %v603
        %v619 = vrot.slane %v618, 4
        %v620 = vadd.f32 %v618, %v619
        %v621 = vrot.slane %v620, 2
        %v622 = vadd.f32 %v620, %v621
        %v623 = vrot.slane %v622, 1
        %v624 = vadd.f32 %v622, %v623
        %v625 = vadd.f32 %v587, %v624
        %626 = vst [vmem:[#allocation3] sm:$0x1] %v625
        %vm627 = vcmask 7168
        %628 = vst.msk [vmem:[%s294] sm:$0xff] %vm627, 0.0
        %629 = vst.msk [vmem:[%s294 + $0x8] sm:$0xff] %vm627, 0.0
        %630 = vst.msk [vmem:[%s294 + $0x10] sm:$0xff] %vm627, 0.0
        %631 = vst.msk [vmem:[%s294 + $0x18] sm:$0xff] %vm627, 0.0
        %632 = vst.msk [vmem:[%s294 + $0x20] sm:$0xff] %vm627, 0.0
        %633 = vst.msk [vmem:[%s294 + $0x28] sm:$0xff] %vm627, 0.0
        %634 = vst.msk [vmem:[%s294 + $0x30] sm:$0xff] %vm627, 0.0
        %635 = vst.msk [vmem:[%s294 + $0x38] sm:$0xff] %vm627, 0.0
        %636 = vst.msk [vmem:[%s294 + $0x40] sm:$0xff] %vm627, 0.0
        %637 = vst.msk [vmem:[%s294 + $0x48] sm:$0xff] %vm627, 0.0
        %638 = vst.msk [vmem:[%s294 + $0x50] sm:$0xff] %vm627, 0.0
        %639 = vst.msk [vmem:[%s294 + $0x58] sm:$0xff] %vm627, 0.0
        %640 = vst.msk [vmem:[%s294 + $0x60] sm:$0xff] %vm627, 0.0
        %641 = vst.msk [vmem:[%s294 + $0x68] sm:$0xff] %vm627, 0.0
        %642 = vst.msk [vmem:[%s294 + $0x70] sm:$0xff] %vm627, 0.0
        %643 = vst.msk [vmem:[%s294 + $0x78] sm:$0xff] %vm627, 0.0
      $region52: #{tpu_custom_call.1} parent=47 // pred_fallthru
        _
      %p644 = scmp.eq.s32.totalorder %s24, 1
      // Predicated region
      $region57: #{tpu_custom_call.1} parent=47 // pred_check
        %p645 = pneg %p644
      $region58: #{tpu_custom_call.1} parent=47 // pred_check_branch
        %647 = sbr.rel (%p645) target = $region60
      $region59: #{tpu_custom_call.1} parent=47 // pred_region
        %p648 = scmp.eq.s32.totalorder %s25, 0
        // Predicated region
        $region61: #{tpu_custom_call.1} parent=59 // pred_check
          %p649 = pneg %p648
        $region62: #{tpu_custom_call.1} parent=59 // pred_check_branch
          %651 = sbr.rel (%p649) target = $region64
        $region63: #{tpu_custom_call.1} parent=59 // pred_region
          %v652 = vld [vmem:[#allocation2] sm:$0x1]
          %v653 = vmul.f32 %v652, 0.0033333334
          %v654 = vld [vmem:[#allocation3] sm:$0x1]
          %v655 = vmul.f32 %v654, 0.0033333334
          %v656 = vmul.f32 %v653, %v653
          %v657 = vsub.f32 %v655, %v656
          %v658 = vmax.f32 %v657, 0.0
          %v659 = vadd.f32 %v658, 1e-05
          %v660 = vrsqrt.pop %v659
          %v661 = vmul.f32 %v660, %v659
          %v662 = vmul.f32 %v661, %v660
          %v663 = vmul.f32 0.5, %v662
          %v664 = vsub.f32 1.5, %v663
          %v665 = vmul.f32 %v660, %v664
          %vm666 = vweird.f32 %v659
          %vm667 = vweird.f32 %v660
          %vm668 = vmor %vm666, %vm667
          %v669 = vsel %vm668, %v660, %v665
          %670 = vst [vmem:[#allocation4] sm:$0x1] %v653
          %v671 = vld [vmem:[%s3] sm:$0x1]
          %v672 = vmul.f32 %v669, %v671
          %v673 = vld [vmem:[%s5] sm:$0x1]
          %v674 = vmul.f32 %v672, %v673
          %675 = vst [vmem:[#allocation5] sm:$0x1] %v674
          %v676 = vld [vmem:[%s4] sm:$0x1]
          %v677 = vld [vmem:[%s5] sm:$0x1]
          %v678 = vmul.f32 %v676, %v677
          %vm679 = vcmask 1040384
          %v680 = vsel %vm679, %v678, 0.0
          %681 = vadd.xlane.f32.xlu0 %v680
          %v682 = vpop.xlane.xlu0 %681
          %v683 = vld [vmem:[#allocation7] sm:$0x1]
          %v684 = vadd.f32 %v682, %v683
          %vm685 = vcmask 0
          %686 = vst.msk [vmem:[#allocation6] sm:$0x1] %vm685, %v684
        $region64: #{tpu_custom_call.1} parent=59 // pred_fallthru
          _
        %v687 = vld [vmem:[#allocation4] sm:$0x1]
        %v689 = vperm.slane %v687, 0
        %v691 = vsub.f32 %v438, %v689
        %v692 = vsub.f32 %v439, %v689
        %v693 = vsub.f32 %v440, %v689
        %v694 = vsub.f32 %v441, %v689
        %v695 = vsub.f32 %v442, %v689
        %v696 = vsub.f32 %v443, %v689
        %v697 = vsub.f32 %v444, %v689
        %v698 = vsub.f32 %v445, %v689
        %v699 = vsub.f32 %v446, %v689
        %v700 = vsub.f32 %v447, %v689
        %v701 = vsub.f32 %v448, %v689
        %v702 = vsub.f32 %v449, %v689
        %v703 = vsub.f32 %v450, %v689
        %v704 = vsub.f32 %v451, %v689
        %v705 = vsub.f32 %v452, %v689
        %v706 = vsub.f32 %v453, %v689
        %v707 = vld [vmem:[#allocation5] sm:$0x1]
        %v709 = vperm.slane %v707, 0
        %v711 = vmul.f32 %v691, %v709
        %v712 = vmul.f32 %v692, %v709
        %v713 = vmul.f32 %v693, %v709
        %v714 = vmul.f32 %v694, %v709
        %v715 = vmul.f32 %v695, %v709
        %v716 = vmul.f32 %v696, %v709
        %v717 = vmul.f32 %v697, %v709
        %v718 = vmul.f32 %v698, %v709
        %v719 = vmul.f32 %v699, %v709
        %v720 = vmul.f32 %v700, %v709
        %v721 = vmul.f32 %v701, %v709
        %v722 = vmul.f32 %v702, %v709
        %v723 = vmul.f32 %v703, %v709
        %v724 = vmul.f32 %v704, %v709
        %v725 = vmul.f32 %v705, %v709
        %v726 = vmul.f32 %v706, %v709
        %727 = vadd.xlane.f32.xlu0 %v711
        %v728 = vpop.xlane.xlu0 %727
        %729 = vadd.xlane.f32.xlu0 %v712
        %v730 = vpop.xlane.xlu0 %729
        %731 = vadd.xlane.f32.xlu0 %v713
        %v732 = vpop.xlane.xlu0 %731
        %733 = vadd.xlane.f32.xlu0 %v714
        %v734 = vpop.xlane.xlu0 %733
        %735 = vadd.xlane.f32.xlu0 %v715
        %v736 = vpop.xlane.xlu0 %735
        %737 = vadd.xlane.f32.xlu0 %v716
        %v738 = vpop.xlane.xlu0 %737
        %739 = vadd.xlane.f32.xlu0 %v717
        %v740 = vpop.xlane.xlu0 %739
        %741 = vadd.xlane.f32.xlu0 %v718
        %v742 = vpop.xlane.xlu0 %741
        %743 = vadd.xlane.f32.xlu0 %v719
        %v744 = vpop.xlane.xlu0 %743
        %745 = vadd.xlane.f32.xlu0 %v720
        %v746 = vpop.xlane.xlu0 %745
        %747 = vadd.xlane.f32.xlu0 %v721
        %v748 = vpop.xlane.xlu0 %747
        %749 = vadd.xlane.f32.xlu0 %v722
        %v750 = vpop.xlane.xlu0 %749
        %751 = vadd.xlane.f32.xlu0 %v723
        %v752 = vpop.xlane.xlu0 %751
        %753 = vadd.xlane.f32.xlu0 %v724
        %v754 = vpop.xlane.xlu0 %753
        %755 = vadd.xlane.f32.xlu0 %v725
        %v756 = vpop.xlane.xlu0 %755
        %757 = vadd.xlane.f32.xlu0 %v726
        %v758 = vpop.xlane.xlu0 %757
        %v759 = vld [vmem:[#allocation6] sm:$0x1]
        %v761 = vperm.slane %v759, 0
        %v763 = vadd.f32 %v728, %v761
        %v764 = vadd.f32 %v730, %v761
        %v765 = vadd.f32 %v732, %v761
        %v766 = vadd.f32 %v734, %v761
        %v767 = vadd.f32 %v736, %v761
        %v768 = vadd.f32 %v738, %v761
        %v769 = vadd.f32 %v740, %v761
        %v770 = vadd.f32 %v742, %v761
        %v771 = vadd.f32 %v744, %v761
        %v772 = vadd.f32 %v746, %v761
        %v773 = vadd.f32 %v748, %v761
        %v774 = vadd.f32 %v750, %v761
        %v775 = vadd.f32 %v752, %v761
        %v776 = vadd.f32 %v754, %v761
        %v777 = vadd.f32 %v756, %v761
        %v778 = vadd.f32 %v758, %v761
        %vm779 = vcmask 7168
        %780 = vst.msk [vmem:[%s294] sm:$0xff] %vm779, %v763
        %781 = vst.msk [vmem:[%s294 + $0x8] sm:$0xff] %vm779, %v764
        %782 = vst.msk [vmem:[%s294 + $0x10] sm:$0xff] %vm779, %v765
        %783 = vst.msk [vmem:[%s294 + $0x18] sm:$0xff] %vm779, %v766
        %784 = vst.msk [vmem:[%s294 + $0x20] sm:$0xff] %vm779, %v767
        %785 = vst.msk [vmem:[%s294 + $0x28] sm:$0xff] %vm779, %v768
        %786 = vst.msk [vmem:[%s294 + $0x30] sm:$0xff] %vm779, %v769
        %787 = vst.msk [vmem:[%s294 + $0x38] sm:$0xff] %vm779, %v770
        %788 = vst.msk [vmem:[%s294 + $0x40] sm:$0xff] %vm779, %v771
        %789 = vst.msk [vmem:[%s294 + $0x48] sm:$0xff] %vm779, %v772
        %790 = vst.msk [vmem:[%s294 + $0x50] sm:$0xff] %vm779, %v773
        %791 = vst.msk [vmem:[%s294 + $0x58] sm:$0xff] %vm779, %v774
        %792 = vst.msk [vmem:[%s294 + $0x60] sm:$0xff] %vm779, %v775
        %793 = vst.msk [vmem:[%s294 + $0x68] sm:$0xff] %vm779, %v776
        %794 = vst.msk [vmem:[%s294 + $0x70] sm:$0xff] %vm779, %v777
        %795 = vst.msk [vmem:[%s294 + $0x78] sm:$0xff] %vm779, %v778
      $region60: #{tpu_custom_call.1} parent=47 // pred_fallthru
        _
      %s796 = smul.u32 16, %s25
      %p797 = scmp.lt.s32.totalorder %s796, 47
      %s798 = scalar_select %p797, %s796, 47
      %s799 = smul.addr %s798, 8
      %s800 = scalar_lea.vmem %s7, %s799
      // Predicated region
      $region65: #{tpu_custom_call.1} parent=47 // pred_check
        %p801 = pneg %p202
      $region66: #{tpu_custom_call.1} parent=47 // pred_check_branch
        %803 = sbr.rel (%p801) target = $region68
      $region67: #{tpu_custom_call.1} parent=47 // pred_region
        %s804 = smul.u32 16, %s25
      $region68: #{tpu_custom_call.1} parent=47 // pred_fallthru
        _
    $region48: #{tpu_custom_call.1} parent=5 // pred_fallthru
      _
    %p805 = scmp.le.s32.totalorder 2, %s15
    // Predicated region
    $region69: #{tpu_custom_call.1} parent=5 // pred_check
      %p806 = pneg %p805
    $region70: #{tpu_custom_call.1} parent=5 // pred_check_branch
      %808 = sbr.rel (%p806) target = $region72
    $region71: #{tpu_custom_call.1} parent=5 // pred_region
      %s809 = ssub.s32 %s15, 2
      // Predicated region
      $region73: #{tpu_custom_call.1} parent=71 // pred_check
        %p810 = pneg %p208
      $region74: #{tpu_custom_call.1} parent=71 // pred_check_branch
        %812 = sbr.rel (%p810) target = $region76
      $region75: #{tpu_custom_call.1} parent=71 // pred_region
        %s813 = smul.u32 16, %s27
        %p814 = scmp.lt.s32.totalorder %s813, 47
        %s815 = scalar_select %p814, %s813, 47
        %s816 = smul.addr %s815, 8
        %s817 = scalar_lea.vmem %s7, %s816
      $region76: #{tpu_custom_call.1} parent=71 // pred_fallthru
        _
    $region72: #{tpu_custom_call.1} parent=5 // pred_fallthru
      _
  $region6: #{tpu_custom_call.1} parent=0 // loop_footer
    %s19 = sadd.s32 1, %s15
  $region7: #{tpu_custom_call.1} parent=0 // loop_footer_branch
    %14 = sbr.rel target = $region3
  $region8: #{tpu_custom_call.1} parent=0 // loop_exit
    _

</llo_original>
